<compile_context>
chip_gen: v7x
topology: tpu7x:2x2x1
jax: 0.10.0
libtpu: 0.0.40
codegen_flags: <defaults>
</compile_context>

<pallas_src>
import functools

import jax
import jax.numpy as jnp
from jax.experimental import pallas as pl
from jax.experimental.pallas import tpu as pltpu


def _mf_kernel(u_ref, v_ref, b_ref, out_ref):
    # u_ref, v_ref: (TB, D) gathered embedding tiles (batch on sublanes).
    # b_ref, out_ref: (TB, 1) item-bias / rating tiles.
    u = u_ref[...].astype(jnp.float32)
    v = v_ref[...].astype(jnp.float32)
    dot = jnp.sum(u * v, axis=-1, keepdims=True)          # (TB, 1) lane reduce (XLU)
    out_ref[...] = dot + b_ref[...].astype(jnp.float32)   # + item bias (VPU)


def _pick_tb(batch, embed_dim, itemsize, *, max_tb=16 * 1024,
             vmem_budget_bytes=8 << 20):
    """Batch-tile size: multiple of 128, VMEM-bounded, >=2 tiles when possible."""
    # 2 embedding inputs x 2 pipeline buffers of (tb, D) dominate VMEM use.
    bytes_per_row = 2 * 2 * embed_dim * itemsize
    tb = min(max_tb, max(128, vmem_budget_bytes // bytes_per_row))
    tb = (tb // 128) * 128
    b_pad = -(-batch // 128) * 128
    tb = min(tb, b_pad)
    # v7x: prefer at least 2 grid tiles so both TensorCores get work.
    if b_pad >= 256 and b_pad <= tb:
        tb = -(-(b_pad // 2) // 128) * 128
    return max(tb, 128)


@functools.partial(jax.jit, static_argnames=("tb",))
def mf_forward(user_ids, item_ids, user_emb, item_emb, item_bias, *, tb=None):
    """Pallas implementation of _MF.forward(user_ids, item_ids) -> (B,) ratings."""
    assert user_ids.shape == item_ids.shape
    B = user_ids.shape[0]
    D = user_emb.shape[1]

    if B == 0:
        return jnp.zeros((0,), jnp.float32)

    if tb is None:
        tb = _pick_tb(B, D, jnp.dtype(user_emb.dtype).itemsize)
    assert tb % 128 == 0, "batch tile must be a multiple of 128 (lane width)"

    b_pad = pl.cdiv(B, tb) * tb
    n_tiles = b_pad // tb

    # Pad the batch up to a multiple of the tile size; padded slots gather
    # row 0 (always valid) and are sliced off at the end.
    uid = jnp.pad(user_ids.astype(jnp.int32), (0, b_pad - B))
    iid = jnp.pad(item_ids.astype(jnp.int32), (0, b_pad - B))

    # Batched XLA row gather, NO transpose: batch on sublanes, D on lanes.
    # allow_input_fusion below lets XLA fuse these producers into the Pallas
    # input pipeline instead of materializing them in HBM first.
    u_g = jnp.take(user_emb, uid, axis=0)          # (b_pad, D)
    v_g = jnp.take(item_emb, iid, axis=0)          # (b_pad, D)
    bias_g = jnp.take(item_bias, iid, axis=0)      # (b_pad, 1)

    out = pl.pallas_call(
        _mf_kernel,
        out_shape=jax.ShapeDtypeStruct((b_pad, 1), jnp.float32),
        grid=(n_tiles,),
        in_specs=[
            pl.BlockSpec((tb, D), lambda i: (i, 0)),   # user embedding tile
            pl.BlockSpec((tb, D), lambda i: (i, 0)),   # item embedding tile
            pl.BlockSpec((tb, 1), lambda i: (i, 0)),   # item bias tile
        ],
        out_specs=pl.BlockSpec((tb, 1), lambda i: (i, 0)),
        compiler_params=pltpu.CompilerParams(
            dimension_semantics=("parallel",),
            allow_input_fusion=[True, True, True],
        ),
    )(u_g, v_g, bias_g)

    return out[:B, 0]


if __name__ == "__main__":
    num_users, num_items, embed_dim = 32, 48, 32
    batch = 8

    key = jax.random.PRNGKey(0)
    k_u, k_i, k_uid, k_iid = jax.random.split(key, 4)

    # reset_parameters(): normal init for embeddings, zeros for item biases.
    user_emb = jax.random.normal(k_u, (num_users, embed_dim), jnp.float32) * 0.01
    item_emb = jax.random.normal(k_i, (num_items, embed_dim), jnp.float32) * 0.01
    # Perturb the (zero-init) biases so the bias-add path is actually exercised.
    item_bias = 0.001 * jnp.arange(num_items, dtype=jnp.float32)[:, None]

    user_ids = jax.random.randint(k_uid, (batch,), 0, num_users, dtype=jnp.int32)
    item_ids = jax.random.randint(k_iid, (batch,), 0, num_items, dtype=jnp.int32)

    out = mf_forward(user_ids, item_ids, user_emb, item_emb, item_bias)
    out = jax.block_until_ready(out)

    # Pure-JAX reference of the PyTorch forward.
    ref = jnp.sum(user_emb[user_ids] * item_emb[item_ids], axis=-1) \
        + item_bias[item_ids, 0]

    assert out.shape == (batch,)
    assert jnp.allclose(out, ref, atol=1e-6, rtol=1e-6), (out, ref)
    print("KERNEL_OK")
</pallas_src>

<mosaic_0001>
module attributes {stable_mosaic.version = 11 : i64} {
  func.func @_mf_kernel(%arg0: i32, %arg1: memref<128x32xf32, #tpu.memory_space<vmem>>, %arg2: memref<128x32xf32, #tpu.memory_space<vmem>>, %arg3: memref<128x1xf32, #tpu.memory_space<vmem>>, %arg4: memref<128x1xf32, #tpu.memory_space<vmem>>) attributes {dimension_semantics = [#tpu.dimension_semantics<parallel>], iteration_bounds = array<i64: 1>, scalar_prefetch = 0 : i64, scratch_operands = 0 : i64, tpu.core_type = #tpu.core_type<tc>, window_params = [{transform_indices = @transform_0, window_bounds = array<i64: 128, 32>}, {transform_indices = @transform_1, window_bounds = array<i64: 128, 32>}, {transform_indices = @transform_2, window_bounds = array<i64: 128, 1>}, {transform_indices = @transform_3, window_bounds = array<i64: 128, 1>}]} {
    %c0 = arith.constant 0 : index
    %c0_0 = arith.constant 0 : index
    %0 = vector.load %arg1[%c0, %c0_0] : memref<128x32xf32, #tpu.memory_space<vmem>>, vector<128x32xf32>
    %c0_1 = arith.constant 0 : index
    %c0_2 = arith.constant 0 : index
    %1 = vector.load %arg2[%c0_1, %c0_2] : memref<128x32xf32, #tpu.memory_space<vmem>>, vector<128x32xf32>
    %2 = arith.mulf %0, %1 : vector<128x32xf32>
    %cst = arith.constant dense<0.000000e+00> : vector<128xf32>
    %3 = vector.multi_reduction <add>, %2, %cst [1] : vector<128x32xf32> to vector<128xf32>
    %4 = vector.shape_cast %3 : vector<128xf32> to vector<128x1xf32>
    %c0_3 = arith.constant 0 : index
    %c0_4 = arith.constant 0 : index
    %5 = vector.load %arg3[%c0_3, %c0_4] : memref<128x1xf32, #tpu.memory_space<vmem>>, vector<128x1xf32>
    %6 = arith.addf %4, %5 : vector<128x1xf32>
    %c0_5 = arith.constant 0 : index
    %c0_6 = arith.constant 0 : index
    %7 = vector.load %arg4[%c0_5, %c0_6] : memref<128x1xf32, #tpu.memory_space<vmem>>, vector<128x1xf32>
    tpu.vector_store %arg4[%c0_5, %c0_6], %6 {strides = array<i32>} : memref<128x1xf32, #tpu.memory_space<vmem>>, vector<128x1xf32>,
    return
  }
  func.func @transform_0(%arg0: i32) -> (i32, i32) {
    %c0_i32 = arith.constant 0 : i32
    %c0_i32_0 = arith.constant 0 : i32
    return %arg0, %c0_i32 : i32, i32
  }
  func.func @transform_1(%arg0: i32) -> (i32, i32) {
    %c0_i32 = arith.constant 0 : i32
    %c0_i32_0 = arith.constant 0 : i32
    return %arg0, %c0_i32 : i32, i32
  }
  func.func @transform_2(%arg0: i32) -> (i32, i32) {
    %c0_i32 = arith.constant 0 : i32
    %c0_i32_0 = arith.constant 0 : i32
    return %arg0, %c0_i32 : i32, i32
  }
  func.func @transform_3(%arg0: i32) -> (i32, i32) {
    %c0_i32 = arith.constant 0 : i32
    %c0_i32_0 = arith.constant 0 : i32
    return %arg0, %c0_i32 : i32, i32
  }
}

</mosaic_0001>

<llo_original>
// kernel: mf_forward.2
$region0: #{mf_forward.2}
  #allocation0 [shape = 'u32[]', space=smem, size = 0x4, offset = 0x4, fixed_abs, tag = 'smem constant byte address 0x4 - core index']
  #allocation1 [shape = 'u32[144,128]{1,0:T(1,128)}', space=vmem, size = 0x12000, scoped, tag = 'internal scratch']
  %s0 = inlined_call_operand.vmem [shape: f32[128,1], index: 0, kind: input, shape index: {}]
  %s1 = inlined_call_operand.vmem [shape: f32[128,32], index: 1, kind: input, shape index: {}]
  %s2 = inlined_call_operand.vmem [shape: f32[128,32], index: 2, kind: input, shape index: {}]
  %s3 = inlined_call_operand.<no memory space> [shape: f32[], index: 3, kind: input, shape index: {}]
  %s4 = inlined_call_operand.vmem [shape: pred[128], index: 4, kind: input, shape index: {}]
  %s5 = inlined_call_operand.vmem [shape: pred[128], index: 5, kind: input, shape index: {}]
  %s6 = inlined_call_operand.vmem [shape: f32[128,1], index: 6, kind: output, shape index: {}]
  %s7 = sld [smem:[#allocation0]]
  $region30: #{mf_forward.2} parent=0
    _
  %s9 = ssub.s32 1, %s7
  %s10 = scalar_select 0, %s9, %s7
  %v11 = vstv %s3
  %v12 = vstv %s3
  $region1: #{mf_forward.2} parent=0
    #allocation2 [shape = 'u8[65536]{0}', space=vmem, size = 0x10000, dematerialized = true, scoped, tag = 'FusionAdapter Buffer %fusion.2 = f32[128,32]{1,0:T(8,128)} fusion(%param_2.9, %param_3.4, %param_5.3), kind=kLoop, calls=%fused_computation.5.clone, metadata={op_name="jit(mf_forward)/jit(_take)/select_n" stack_frame_id=3}']
    #allocation3 [shape = 'u8[65536]{0}', space=vmem, size = 0x10000, dematerialized = true, scoped, tag = 'FusionAdapter Buffer %fusion.1 = f32[128,32]{1,0:T(8,128)} fusion(%param_1.20, %param_3.4, %param_4.4), kind=kLoop, calls=%fused_computation.4.clone, metadata={op_name="jit(mf_forward)/jit(_take)/select_n" stack_frame_id=4}']
    // Predicated region
    $region2: #{mf_forward.2} parent=1 // pred_check
      _
    $region3: #{mf_forward.2} parent=1 // pred_check_branch
      %14 = sbr.rel (0) target = $region5
    $region4: #{mf_forward.2} parent=1 // pred_region
      _
    $region5: #{mf_forward.2} parent=1 // pred_fallthru
      _
    // Predicated region
    $region6: #{mf_forward.2} parent=1 // pred_check
      _
    $region7: #{mf_forward.2} parent=1 // pred_check_branch
      %16 = sbr.rel (0) target = $region9
    $region8: #{mf_forward.2} parent=1 // pred_region
      _
    $region9: #{mf_forward.2} parent=1 // pred_fallthru
      _
    // Predicated region
    $region10: #{mf_forward.2} parent=1 // pred_check
      _
    $region11: #{mf_forward.2} parent=1 // pred_check_branch
      %18 = sbr.rel (0) target = $region13
    $region12: #{mf_forward.2} parent=1 // pred_region
      _
    $region13: #{mf_forward.2} parent=1 // pred_fallthru
      _
    // Predicated region
    $region14: #{mf_forward.2} parent=1 // pred_check
      _
    $region15: #{mf_forward.2} parent=1 // pred_check_branch
      %20 = sbr.rel (0) target = $region17
    $region16: #{mf_forward.2} parent=1 // pred_region
      _
    $region17: #{mf_forward.2} parent=1 // pred_fallthru
      _
    // Predicated region
    $region18: #{mf_forward.2} parent=1 // pred_check
      _
    $region19: #{mf_forward.2} parent=1 // pred_check_branch
      %22 = sbr.rel (0) target = $region21
    $region20: #{mf_forward.2} parent=1 // pred_region
      _
    $region21: #{mf_forward.2} parent=1 // pred_fallthru
      _
    %v23 = vld [vmem:[%s2] sm:$0xff]
    %v24 = vld [vmem:[%s5] ss:$0 sm:$0xff]
    %v26 = vshra.s32 %v24, 0
    %v27 = vand.u32 %v26, 255
    %29 = vbcast.lane.b32.xlu0 %v27, 256
    %v30 = vpop.permute.xlu0 %29
    %31 = xla_tuple %v30, %v23, %v11
    %32 = xla_tuple %31
    %vm33 = vcmp.ne.s32.totalorder %v30, 0
    %v34 = vsel %vm33, %v23, %v11
    %35 = xla_tuple %v34
    %37 = vst [vmem:[#allocation2] sm:$0xff] %v34
    %s38 = scalar_lea.vmem %s2, 8
    %v39 = vld [vmem:[%s38] sm:$0xff]
    %v40 = vld [vmem:[%s5] ss:$0 sm:$0xff]
    %v42 = vshra.s32 %v40, 0
    %v43 = vand.u32 %v42, 255
    %s45 = sor.u32 256, 8
    %46 = vbcast.lane.b32.xlu0 %v43, %s45
    %v47 = vpop.permute.xlu0 %46
    %48 = xla_tuple %v47, %v39, %v11
    %49 = xla_tuple %48
    %vm50 = vcmp.ne.s32.totalorder %v47, 0
    %v51 = vsel %vm50, %v39, %v11
    %52 = xla_tuple %v51
    %s53 = scalar_lea.vmem [#allocation2], 8
    %55 = vst [vmem:[%s53] sm:$0xff] %v51
    %s56 = scalar_lea.vmem %s2, 16
    %v57 = vld [vmem:[%s56] sm:$0xff]
    %v58 = vld [vmem:[%s5] ss:$0 sm:$0xff]
    %v60 = vshra.s32 %v58, 0
    %v61 = vand.u32 %v60, 255
    %s63 = sor.u32 256, 16
    %64 = vbcast.lane.b32.xlu0 %v61, %s63
    %v65 = vpop.permute.xlu0 %64
    %66 = xla_tuple %v65, %v57, %v11
    %67 = xla_tuple %66
    %vm68 = vcmp.ne.s32.totalorder %v65, 0
    %v69 = vsel %vm68, %v57, %v11
    %70 = xla_tuple %v69
    %s71 = scalar_lea.vmem [#allocation2], 16
    %73 = vst [vmem:[%s71] sm:$0xff] %v69
    %s74 = scalar_lea.vmem %s2, 24
    %v75 = vld [vmem:[%s74] sm:$0xff]
    %v76 = vld [vmem:[%s5] ss:$0 sm:$0xff]
    %v78 = vshra.s32 %v76, 0
    %v79 = vand.u32 %v78, 255
    %s81 = sor.u32 256, 24
    %82 = vbcast.lane.b32.xlu0 %v79, %s81
    %v83 = vpop.permute.xlu0 %82
    %84 = xla_tuple %v83, %v75, %v11
    %85 = xla_tuple %84
    %vm86 = vcmp.ne.s32.totalorder %v83, 0
    %v87 = vsel %vm86, %v75, %v11
    %88 = xla_tuple %v87
    %s89 = scalar_lea.vmem [#allocation2], 24
    %91 = vst [vmem:[%s89] sm:$0xff] %v87
    %s92 = scalar_lea.vmem %s2, 32
    %v93 = vld [vmem:[%s92] sm:$0xff]
    %v94 = vld [vmem:[%s5] ss:$0 sm:$0xff]
    %v96 = vshra.s32 %v94, 0
    %v97 = vand.u32 %v96, 255
    %s99 = sor.u32 256, 32
    %100 = vbcast.lane.b32.xlu0 %v97, %s99
    %v101 = vpop.permute.xlu0 %100
    %102 = xla_tuple %v101, %v93, %v11
    %103 = xla_tuple %102
    %vm104 = vcmp.ne.s32.totalorder %v101, 0
    %v105 = vsel %vm104, %v93, %v11
    %106 = xla_tuple %v105
    %s107 = scalar_lea.vmem [#allocation2], 32
    %109 = vst [vmem:[%s107] sm:$0xff] %v105
    %s110 = scalar_lea.vmem %s2, 40
    %v111 = vld [vmem:[%s110] sm:$0xff]
    %v112 = vld [vmem:[%s5] ss:$0 sm:$0xff]
    %v114 = vshra.s32 %v112, 0
    %v115 = vand.u32 %v114, 255
    %s117 = sor.u32 256, 40
    %118 = vbcast.lane.b32.xlu0 %v115, %s117
    %v119 = vpop.permute.xlu0 %118
    %120 = xla_tuple %v119, %v111, %v11
    %121 = xla_tuple %120
    %vm122 = vcmp.ne.s32.totalorder %v119, 0
    %v123 = vsel %vm122, %v111, %v11
    %124 = xla_tuple %v123
    %s125 = scalar_lea.vmem [#allocation2], 40
    %127 = vst [vmem:[%s125] sm:$0xff] %v123
    %s128 = scalar_lea.vmem %s2, 48
    %v129 = vld [vmem:[%s128] sm:$0xff]
    %v130 = vld [vmem:[%s5] ss:$0 sm:$0xff]
    %v132 = vshra.s32 %v130, 0
    %v133 = vand.u32 %v132, 255
    %s135 = sor.u32 256, 48
    %136 = vbcast.lane.b32.xlu0 %v133, %s135
    %v137 = vpop.permute.xlu0 %136
    %138 = xla_tuple %v137, %v129, %v11
    %139 = xla_tuple %138
    %vm140 = vcmp.ne.s32.totalorder %v137, 0
    %v141 = vsel %vm140, %v129, %v11
    %142 = xla_tuple %v141
    %s143 = scalar_lea.vmem [#allocation2], 48
    %145 = vst [vmem:[%s143] sm:$0xff] %v141
    %s146 = scalar_lea.vmem %s2, 56
    %v147 = vld [vmem:[%s146] sm:$0xff]
    %v148 = vld [vmem:[%s5] ss:$0 sm:$0xff]
    %v150 = vshra.s32 %v148, 0
    %v151 = vand.u32 %v150, 255
    %s153 = sor.u32 256, 56
    %154 = vbcast.lane.b32.xlu0 %v151, %s153
    %v155 = vpop.permute.xlu0 %154
    %156 = xla_tuple %v155, %v147, %v11
    %157 = xla_tuple %156
    %vm158 = vcmp.ne.s32.totalorder %v155, 0
    %v159 = vsel %vm158, %v147, %v11
    %160 = xla_tuple %v159
    %s161 = scalar_lea.vmem [#allocation2], 56
    %163 = vst [vmem:[%s161] sm:$0xff] %v159
    %s164 = scalar_lea.vmem %s2, 64
    %v165 = vld [vmem:[%s164] sm:$0xff]
    %v166 = vld [vmem:[%s5] ss:$0 sm:$0xff]
    %v168 = vshra.s32 %v166, 0
    %v169 = vand.u32 %v168, 255
    %s171 = sor.u32 256, 64
    %172 = vbcast.lane.b32.xlu0 %v169, %s171
    %v173 = vpop.permute.xlu0 %172
    %174 = xla_tuple %v173, %v165, %v11
    %175 = xla_tuple %174
    %vm176 = vcmp.ne.s32.totalorder %v173, 0
    %v177 = vsel %vm176, %v165, %v11
    %178 = xla_tuple %v177
    %s179 = scalar_lea.vmem [#allocation2], 64
    %181 = vst [vmem:[%s179] sm:$0xff] %v177
    %s182 = scalar_lea.vmem %s2, 72
    %v183 = vld [vmem:[%s182] sm:$0xff]
    %v184 = vld [vmem:[%s5] ss:$0 sm:$0xff]
    %v186 = vshra.s32 %v184, 0
    %v187 = vand.u32 %v186, 255
    %s189 = sor.u32 256, 72
    %190 = vbcast.lane.b32.xlu0 %v187, %s189
    %v191 = vpop.permute.xlu0 %190
    %192 = xla_tuple %v191, %v183, %v11
    %193 = xla_tuple %192
    %vm194 = vcmp.ne.s32.totalorder %v191, 0
    %v195 = vsel %vm194, %v183, %v11
    %196 = xla_tuple %v195
    %s197 = scalar_lea.vmem [#allocation2], 72
    %199 = vst [vmem:[%s197] sm:$0xff] %v195
    %s200 = scalar_lea.vmem %s2, 80
    %v201 = vld [vmem:[%s200] sm:$0xff]
    %v202 = vld [vmem:[%s5] ss:$0 sm:$0xff]
    %v204 = vshra.s32 %v202, 0
    %v205 = vand.u32 %v204, 255
    %s207 = sor.u32 256, 80
    %208 = vbcast.lane.b32.xlu0 %v205, %s207
    %v209 = vpop.permute.xlu0 %208
    %210 = xla_tuple %v209, %v201, %v11
    %211 = xla_tuple %210
    %vm212 = vcmp.ne.s32.totalorder %v209, 0
    %v213 = vsel %vm212, %v201, %v11
    %214 = xla_tuple %v213
    %s215 = scalar_lea.vmem [#allocation2], 80
    %217 = vst [vmem:[%s215] sm:$0xff] %v213
    %s218 = scalar_lea.vmem %s2, 88
    %v219 = vld [vmem:[%s218] sm:$0xff]
    %v220 = vld [vmem:[%s5] ss:$0 sm:$0xff]
    %v222 = vshra.s32 %v220, 0
    %v223 = vand.u32 %v222, 255
    %s225 = sor.u32 256, 88
    %226 = vbcast.lane.b32.xlu0 %v223, %s225
    %v227 = vpop.permute.xlu0 %226
    %228 = xla_tuple %v227, %v219, %v11
    %229 = xla_tuple %228
    %vm230 = vcmp.ne.s32.totalorder %v227, 0
    %v231 = vsel %vm230, %v219, %v11
    %232 = xla_tuple %v231
    %s233 = scalar_lea.vmem [#allocation2], 88
    %235 = vst [vmem:[%s233] sm:$0xff] %v231
    %s236 = scalar_lea.vmem %s2, 96
    %v237 = vld [vmem:[%s236] sm:$0xff]
    %v238 = vld [vmem:[%s5] ss:$0 sm:$0xff]
    %v240 = vshra.s32 %v238, 0
    %v241 = vand.u32 %v240, 255
    %s243 = sor.u32 256, 96
    %244 = vbcast.lane.b32.xlu0 %v241, %s243
    %v245 = vpop.permute.xlu0 %244
    %246 = xla_tuple %v245, %v237, %v11
    %247 = xla_tuple %246
    %vm248 = vcmp.ne.s32.totalorder %v245, 0
    %v249 = vsel %vm248, %v237, %v11
    %250 = xla_tuple %v249
    %s251 = scalar_lea.vmem [#allocation2], 96
    %253 = vst [vmem:[%s251] sm:$0xff] %v249
    %s254 = scalar_lea.vmem %s2, 104
    %v255 = vld [vmem:[%s254] sm:$0xff]
    %v256 = vld [vmem:[%s5] ss:$0 sm:$0xff]
    %v258 = vshra.s32 %v256, 0
    %v259 = vand.u32 %v258, 255
    %s261 = sor.u32 256, 104
    %262 = vbcast.lane.b32.xlu0 %v259, %s261
    %v263 = vpop.permute.xlu0 %262
    %264 = xla_tuple %v263, %v255, %v11
    %265 = xla_tuple %264
    %vm266 = vcmp.ne.s32.totalorder %v263, 0
    %v267 = vsel %vm266, %v255, %v11
    %268 = xla_tuple %v267
    %s269 = scalar_lea.vmem [#allocation2], 104
    %271 = vst [vmem:[%s269] sm:$0xff] %v267
    %s272 = scalar_lea.vmem %s2, 112
    %v273 = vld [vmem:[%s272] sm:$0xff]
    %v274 = vld [vmem:[%s5] ss:$0 sm:$0xff]
    %v276 = vshra.s32 %v274, 0
    %v277 = vand.u32 %v276, 255
    %s279 = sor.u32 256, 112
    %280 = vbcast.lane.b32.xlu0 %v277, %s279
    %v281 = vpop.permute.xlu0 %280
    %282 = xla_tuple %v281, %v273, %v11
    %283 = xla_tuple %282
    %vm284 = vcmp.ne.s32.totalorder %v281, 0
    %v285 = vsel %vm284, %v273, %v11
    %286 = xla_tuple %v285
    %s287 = scalar_lea.vmem [#allocation2], 112
    %289 = vst [vmem:[%s287] sm:$0xff] %v285
    %s290 = scalar_lea.vmem %s2, 120
    %v291 = vld [vmem:[%s290] sm:$0xff]
    %v292 = vld [vmem:[%s5] ss:$0 sm:$0xff]
    %v294 = vshra.s32 %v292, 0
    %v295 = vand.u32 %v294, 255
    %s297 = sor.u32 256, 120
    %298 = vbcast.lane.b32.xlu0 %v295, %s297
    %v299 = vpop.permute.xlu0 %298
    %300 = xla_tuple %v299, %v291, %v11
    %301 = xla_tuple %300
    %vm302 = vcmp.ne.s32.totalorder %v299, 0
    %v303 = vsel %vm302, %v291, %v11
    %304 = xla_tuple %v303
    %s305 = scalar_lea.vmem [#allocation2], 120
    %307 = vst [vmem:[%s305] sm:$0xff] %v303
    %v308 = vld [vmem:[%s1] sm:$0xff]
    %v309 = vld [vmem:[%s4] ss:$0 sm:$0xff]
    %v311 = vshra.s32 %v309, 0
    %v312 = vand.u32 %v311, 255
    %314 = vbcast.lane.b32.xlu0 %v312, 256
    %v315 = vpop.permute.xlu0 %314
    %316 = xla_tuple %v315, %v308, %v12
    %317 = xla_tuple %316
    %vm318 = vcmp.ne.s32.totalorder %v315, 0
    %v319 = vsel %vm318, %v308, %v12
    %320 = xla_tuple %v319
    %322 = vst [vmem:[#allocation3] sm:$0xff] %v319
    %s323 = scalar_lea.vmem %s1, 8
    %v324 = vld [vmem:[%s323] sm:$0xff]
    %v325 = vld [vmem:[%s4] ss:$0 sm:$0xff]
    %v327 = vshra.s32 %v325, 0
    %v328 = vand.u32 %v327, 255
    %s330 = sor.u32 256, 8
    %331 = vbcast.lane.b32.xlu0 %v328, %s330
    %v332 = vpop.permute.xlu0 %331
    %333 = xla_tuple %v332, %v324, %v12
    %334 = xla_tuple %333
    %vm335 = vcmp.ne.s32.totalorder %v332, 0
    %v336 = vsel %vm335, %v324, %v12
    %337 = xla_tuple %v336
    %s338 = scalar_lea.vmem [#allocation3], 8
    %340 = vst [vmem:[%s338] sm:$0xff] %v336
    %s341 = scalar_lea.vmem %s1, 16
    %v342 = vld [vmem:[%s341] sm:$0xff]
    %v343 = vld [vmem:[%s4] ss:$0 sm:$0xff]
    %v345 = vshra.s32 %v343, 0
    %v346 = vand.u32 %v345, 255
    %s348 = sor.u32 256, 16
    %349 = vbcast.lane.b32.xlu0 %v346, %s348
    %v350 = vpop.permute.xlu0 %349
    %351 = xla_tuple %v350, %v342, %v12
    %352 = xla_tuple %351
    %vm353 = vcmp.ne.s32.totalorder %v350, 0
    %v354 = vsel %vm353, %v342, %v12
    %355 = xla_tuple %v354
    %s356 = scalar_lea.vmem [#allocation3], 16
    %358 = vst [vmem:[%s356] sm:$0xff] %v354
    %s359 = scalar_lea.vmem %s1, 24
    %v360 = vld [vmem:[%s359] sm:$0xff]
    %v361 = vld [vmem:[%s4] ss:$0 sm:$0xff]
    %v363 = vshra.s32 %v361, 0
    %v364 = vand.u32 %v363, 255
    %s366 = sor.u32 256, 24
    %367 = vbcast.lane.b32.xlu0 %v364, %s366
    %v368 = vpop.permute.xlu0 %367
    %369 = xla_tuple %v368, %v360, %v12
    %370 = xla_tuple %369
    %vm371 = vcmp.ne.s32.totalorder %v368, 0
    %v372 = vsel %vm371, %v360, %v12
    %373 = xla_tuple %v372
    %s374 = scalar_lea.vmem [#allocation3], 24
    %376 = vst [vmem:[%s374] sm:$0xff] %v372
    %s377 = scalar_lea.vmem %s1, 32
    %v378 = vld [vmem:[%s377] sm:$0xff]
    %v379 = vld [vmem:[%s4] ss:$0 sm:$0xff]
    %v381 = vshra.s32 %v379, 0
    %v382 = vand.u32 %v381, 255
    %s384 = sor.u32 256, 32
    %385 = vbcast.lane.b32.xlu0 %v382, %s384
    %v386 = vpop.permute.xlu0 %385
    %387 = xla_tuple %v386, %v378, %v12
    %388 = xla_tuple %387
    %vm389 = vcmp.ne.s32.totalorder %v386, 0
    %v390 = vsel %vm389, %v378, %v12
    %391 = xla_tuple %v390
    %s392 = scalar_lea.vmem [#allocation3], 32
    %394 = vst [vmem:[%s392] sm:$0xff] %v390
    %s395 = scalar_lea.vmem %s1, 40
    %v396 = vld [vmem:[%s395] sm:$0xff]
    %v397 = vld [vmem:[%s4] ss:$0 sm:$0xff]
    %v399 = vshra.s32 %v397, 0
    %v400 = vand.u32 %v399, 255
    %s402 = sor.u32 256, 40
    %403 = vbcast.lane.b32.xlu0 %v400, %s402
    %v404 = vpop.permute.xlu0 %403
    %405 = xla_tuple %v404, %v396, %v12
    %406 = xla_tuple %405
    %vm407 = vcmp.ne.s32.totalorder %v404, 0
    %v408 = vsel %vm407, %v396, %v12
    %409 = xla_tuple %v408
    %s410 = scalar_lea.vmem [#allocation3], 40
    %412 = vst [vmem:[%s410] sm:$0xff] %v408
    %s413 = scalar_lea.vmem %s1, 48
    %v414 = vld [vmem:[%s413] sm:$0xff]
    %v415 = vld [vmem:[%s4] ss:$0 sm:$0xff]
    %v417 = vshra.s32 %v415, 0
    %v418 = vand.u32 %v417, 255
    %s420 = sor.u32 256, 48
    %421 = vbcast.lane.b32.xlu0 %v418, %s420
    %v422 = vpop.permute.xlu0 %421
    %423 = xla_tuple %v422, %v414, %v12
    %424 = xla_tuple %423
    %vm425 = vcmp.ne.s32.totalorder %v422, 0
    %v426 = vsel %vm425, %v414, %v12
    %427 = xla_tuple %v426
    %s428 = scalar_lea.vmem [#allocation3], 48
    %430 = vst [vmem:[%s428] sm:$0xff] %v426
    %s431 = scalar_lea.vmem %s1, 56
    %v432 = vld [vmem:[%s431] sm:$0xff]
    %v433 = vld [vmem:[%s4] ss:$0 sm:$0xff]
    %v435 = vshra.s32 %v433, 0
    %v436 = vand.u32 %v435, 255
    %s438 = sor.u32 256, 56
    %439 = vbcast.lane.b32.xlu0 %v436, %s438
    %v440 = vpop.permute.xlu0 %439
    %441 = xla_tuple %v440, %v432, %v12
    %442 = xla_tuple %441
    %vm443 = vcmp.ne.s32.totalorder %v440, 0
    %v444 = vsel %vm443, %v432, %v12
    %445 = xla_tuple %v444
    %s446 = scalar_lea.vmem [#allocation3], 56
    %448 = vst [vmem:[%s446] sm:$0xff] %v444
    %s449 = scalar_lea.vmem %s1, 64
    %v450 = vld [vmem:[%s449] sm:$0xff]
    %v451 = vld [vmem:[%s4] ss:$0 sm:$0xff]
    %v453 = vshra.s32 %v451, 0
    %v454 = vand.u32 %v453, 255
    %s456 = sor.u32 256, 64
    %457 = vbcast.lane.b32.xlu0 %v454, %s456
    %v458 = vpop.permute.xlu0 %457
    %459 = xla_tuple %v458, %v450, %v12
    %460 = xla_tuple %459
    %vm461 = vcmp.ne.s32.totalorder %v458, 0
    %v462 = vsel %vm461, %v450, %v12
    %463 = xla_tuple %v462
    %s464 = scalar_lea.vmem [#allocation3], 64
    %466 = vst [vmem:[%s464] sm:$0xff] %v462
    %s467 = scalar_lea.vmem %s1, 72
    %v468 = vld [vmem:[%s467] sm:$0xff]
    %v469 = vld [vmem:[%s4] ss:$0 sm:$0xff]
    %v471 = vshra.s32 %v469, 0
    %v472 = vand.u32 %v471, 255
    %s474 = sor.u32 256, 72
    %475 = vbcast.lane.b32.xlu0 %v472, %s474
    %v476 = vpop.permute.xlu0 %475
    %477 = xla_tuple %v476, %v468, %v12
    %478 = xla_tuple %477
    %vm479 = vcmp.ne.s32.totalorder %v476, 0
    %v480 = vsel %vm479, %v468, %v12
    %481 = xla_tuple %v480
    %s482 = scalar_lea.vmem [#allocation3], 72
    %484 = vst [vmem:[%s482] sm:$0xff] %v480
    %s485 = scalar_lea.vmem %s1, 80
    %v486 = vld [vmem:[%s485] sm:$0xff]
    %v487 = vld [vmem:[%s4] ss:$0 sm:$0xff]
    %v489 = vshra.s32 %v487, 0
    %v490 = vand.u32 %v489, 255
    %s492 = sor.u32 256, 80
    %493 = vbcast.lane.b32.xlu0 %v490, %s492
    %v494 = vpop.permute.xlu0 %493
    %495 = xla_tuple %v494, %v486, %v12
    %496 = xla_tuple %495
    %vm497 = vcmp.ne.s32.totalorder %v494, 0
    %v498 = vsel %vm497, %v486, %v12
    %499 = xla_tuple %v498
    %s500 = scalar_lea.vmem [#allocation3], 80
    %502 = vst [vmem:[%s500] sm:$0xff] %v498
    %s503 = scalar_lea.vmem %s1, 88
    %v504 = vld [vmem:[%s503] sm:$0xff]
    %v505 = vld [vmem:[%s4] ss:$0 sm:$0xff]
    %v507 = vshra.s32 %v505, 0
    %v508 = vand.u32 %v507, 255
    %s510 = sor.u32 256, 88
    %511 = vbcast.lane.b32.xlu0 %v508, %s510
    %v512 = vpop.permute.xlu0 %511
    %513 = xla_tuple %v512, %v504, %v12
    %514 = xla_tuple %513
    %vm515 = vcmp.ne.s32.totalorder %v512, 0
    %v516 = vsel %vm515, %v504, %v12
    %517 = xla_tuple %v516
    %s518 = scalar_lea.vmem [#allocation3], 88
    %520 = vst [vmem:[%s518] sm:$0xff] %v516
    %s521 = scalar_lea.vmem %s1, 96
    %v522 = vld [vmem:[%s521] sm:$0xff]
    %v523 = vld [vmem:[%s4] ss:$0 sm:$0xff]
    %v525 = vshra.s32 %v523, 0
    %v526 = vand.u32 %v525, 255
    %s528 = sor.u32 256, 96
    %529 = vbcast.lane.b32.xlu0 %v526, %s528
    %v530 = vpop.permute.xlu0 %529
    %531 = xla_tuple %v530, %v522, %v12
    %532 = xla_tuple %531
    %vm533 = vcmp.ne.s32.totalorder %v530, 0
    %v534 = vsel %vm533, %v522, %v12
    %535 = xla_tuple %v534
    %s536 = scalar_lea.vmem [#allocation3], 96
    %538 = vst [vmem:[%s536] sm:$0xff] %v534
    %s539 = scalar_lea.vmem %s1, 104
    %v540 = vld [vmem:[%s539] sm:$0xff]
    %v541 = vld [vmem:[%s4] ss:$0 sm:$0xff]
    %v543 = vshra.s32 %v541, 0
    %v544 = vand.u32 %v543, 255
    %s546 = sor.u32 256, 104
    %547 = vbcast.lane.b32.xlu0 %v544, %s546
    %v548 = vpop.permute.xlu0 %547
    %549 = xla_tuple %v548, %v540, %v12
    %550 = xla_tuple %549
    %vm551 = vcmp.ne.s32.totalorder %v548, 0
    %v552 = vsel %vm551, %v540, %v12
    %553 = xla_tuple %v552
    %s554 = scalar_lea.vmem [#allocation3], 104
    %556 = vst [vmem:[%s554] sm:$0xff] %v552
    %s557 = scalar_lea.vmem %s1, 112
    %v558 = vld [vmem:[%s557] sm:$0xff]
    %v559 = vld [vmem:[%s4] ss:$0 sm:$0xff]
    %v561 = vshra.s32 %v559, 0
    %v562 = vand.u32 %v561, 255
    %s564 = sor.u32 256, 112
    %565 = vbcast.lane.b32.xlu0 %v562, %s564
    %v566 = vpop.permute.xlu0 %565
    %567 = xla_tuple %v566, %v558, %v12
    %568 = xla_tuple %567
    %vm569 = vcmp.ne.s32.totalorder %v566, 0
    %v570 = vsel %vm569, %v558, %v12
    %571 = xla_tuple %v570
    %s572 = scalar_lea.vmem [#allocation3], 112
    %574 = vst [vmem:[%s572] sm:$0xff] %v570
    %s575 = scalar_lea.vmem %s1, 120
    %v576 = vld [vmem:[%s575] sm:$0xff]
    %v577 = vld [vmem:[%s4] ss:$0 sm:$0xff]
    %v579 = vshra.s32 %v577, 0
    %v580 = vand.u32 %v579, 255
    %s582 = sor.u32 256, 120
    %583 = vbcast.lane.b32.xlu0 %v580, %s582
    %v584 = vpop.permute.xlu0 %583
    %585 = xla_tuple %v584, %v576, %v12
    %586 = xla_tuple %585
    %vm587 = vcmp.ne.s32.totalorder %v584, 0
    %v588 = vsel %vm587, %v576, %v12
    %589 = xla_tuple %v588
    %s590 = scalar_lea.vmem [#allocation3], 120
    %592 = vst [vmem:[%s590] sm:$0xff] %v588
    %v593 = vld [vmem:[#allocation2] sm:$0xff]
    %v594 = vld [vmem:[#allocation2 + $0x8] sm:$0xff]
    %v595 = vld [vmem:[#allocation2 + $0x10] sm:$0xff]
    %v596 = vld [vmem:[#allocation2 + $0x18] sm:$0xff]
    %v597 = vld [vmem:[#allocation2 + $0x20] sm:$0xff]
    %v598 = vld [vmem:[#allocation2 + $0x28] sm:$0xff]
    %v599 = vld [vmem:[#allocation2 + $0x30] sm:$0xff]
    %v600 = vld [vmem:[#allocation2 + $0x38] sm:$0xff]
    %v601 = vld [vmem:[#allocation2 + $0x40] sm:$0xff]
    %v602 = vld [vmem:[#allocation2 + $0x48] sm:$0xff]
    %v603 = vld [vmem:[#allocation2 + $0x50] sm:$0xff]
    %v604 = vld [vmem:[#allocation2 + $0x58] sm:$0xff]
    %v605 = vld [vmem:[#allocation2 + $0x60] sm:$0xff]
    %v606 = vld [vmem:[#allocation2 + $0x68] sm:$0xff]
    %v607 = vld [vmem:[#allocation2 + $0x70] sm:$0xff]
    %v608 = vld [vmem:[#allocation2 + $0x78] sm:$0xff]
    %v609 = vld [vmem:[#allocation3] sm:$0xff]
    %v610 = vld [vmem:[#allocation3 + $0x8] sm:$0xff]
    %v611 = vld [vmem:[#allocation3 + $0x10] sm:$0xff]
    %v612 = vld [vmem:[#allocation3 + $0x18] sm:$0xff]
    %v613 = vld [vmem:[#allocation3 + $0x20] sm:$0xff]
    %v614 = vld [vmem:[#allocation3 + $0x28] sm:$0xff]
    %v615 = vld [vmem:[#allocation3 + $0x30] sm:$0xff]
    %v616 = vld [vmem:[#allocation3 + $0x38] sm:$0xff]
    %v617 = vld [vmem:[#allocation3 + $0x40] sm:$0xff]
    %v618 = vld [vmem:[#allocation3 + $0x48] sm:$0xff]
    %v619 = vld [vmem:[#allocation3 + $0x50] sm:$0xff]
    %v620 = vld [vmem:[#allocation3 + $0x58] sm:$0xff]
    %v621 = vld [vmem:[#allocation3 + $0x60] sm:$0xff]
    %v622 = vld [vmem:[#allocation3 + $0x68] sm:$0xff]
    %v623 = vld [vmem:[#allocation3 + $0x70] sm:$0xff]
    %v624 = vld [vmem:[#allocation3 + $0x78] sm:$0xff]
    %v625 = vmul.f32 %v593, %v609
    %v626 = vmul.f32 %v594, %v610
    %v627 = vmul.f32 %v595, %v611
    %v628 = vmul.f32 %v596, %v612
    %v629 = vmul.f32 %v597, %v613
    %v630 = vmul.f32 %v598, %v614
    %v631 = vmul.f32 %v599, %v615
    %v632 = vmul.f32 %v600, %v616
    %v633 = vmul.f32 %v601, %v617
    %v634 = vmul.f32 %v602, %v618
    %v635 = vmul.f32 %v603, %v619
    %v636 = vmul.f32 %v604, %v620
    %v637 = vmul.f32 %v605, %v621
    %v638 = vmul.f32 %v606, %v622
    %v639 = vmul.f32 %v607, %v623
    %v640 = vmul.f32 %v608, %v624
    %vm641 = vcmask 261120
    %v642 = vsel %vm641, %v625, 0.0
    %643 = vadd.xlane.f32.xlu0 %v642
    %v644 = vpop.xlane.xlu0 %643
    %v645 = vsel %vm641, %v626, 0.0
    %646 = vadd.xlane.f32.xlu0 %v645
    %v647 = vpop.xlane.xlu0 %646
    %v648 = vsel %vm641, %v627, 0.0
    %649 = vadd.xlane.f32.xlu0 %v648
    %v650 = vpop.xlane.xlu0 %649
    %v651 = vsel %vm641, %v628, 0.0
    %652 = vadd.xlane.f32.xlu0 %v651
    %v653 = vpop.xlane.xlu0 %652
    %v654 = vsel %vm641, %v629, 0.0
    %655 = vadd.xlane.f32.xlu0 %v654
    %v656 = vpop.xlane.xlu0 %655
    %v657 = vsel %vm641, %v630, 0.0
    %658 = vadd.xlane.f32.xlu0 %v657
    %v659 = vpop.xlane.xlu0 %658
    %v660 = vsel %vm641, %v631, 0.0
    %661 = vadd.xlane.f32.xlu0 %v660
    %v662 = vpop.xlane.xlu0 %661
    %v663 = vsel %vm641, %v632, 0.0
    %664 = vadd.xlane.f32.xlu0 %v663
    %v665 = vpop.xlane.xlu0 %664
    %v666 = vsel %vm641, %v633, 0.0
    %667 = vadd.xlane.f32.xlu0 %v666
    %v668 = vpop.xlane.xlu0 %667
    %v669 = vsel %vm641, %v634, 0.0
    %670 = vadd.xlane.f32.xlu0 %v669
    %v671 = vpop.xlane.xlu0 %670
    %v672 = vsel %vm641, %v635, 0.0
    %673 = vadd.xlane.f32.xlu0 %v672
    %v674 = vpop.xlane.xlu0 %673
    %v675 = vsel %vm641, %v636, 0.0
    %676 = vadd.xlane.f32.xlu0 %v675
    %v677 = vpop.xlane.xlu0 %676
    %v678 = vsel %vm641, %v637, 0.0
    %679 = vadd.xlane.f32.xlu0 %v678
    %v680 = vpop.xlane.xlu0 %679
    %v681 = vsel %vm641, %v638, 0.0
    %682 = vadd.xlane.f32.xlu0 %v681
    %v683 = vpop.xlane.xlu0 %682
    %v684 = vsel %vm641, %v639, 0.0
    %685 = vadd.xlane.f32.xlu0 %v684
    %v686 = vpop.xlane.xlu0 %685
    %v687 = vsel %vm641, %v640, 0.0
    %688 = vadd.xlane.f32.xlu0 %v687
    %v689 = vpop.xlane.xlu0 %688
    %v690 = vld [vmem:[%s0] sm:$0xff]
    %v691 = vld [vmem:[%s0 + $0x8] sm:$0xff]
    %v692 = vld [vmem:[%s0 + $0x10] sm:$0xff]
    %v693 = vld [vmem:[%s0 + $0x18] sm:$0xff]
    %v694 = vld [vmem:[%s0 + $0x20] sm:$0xff]
    %v695 = vld [vmem:[%s0 + $0x28] sm:$0xff]
    %v696 = vld [vmem:[%s0 + $0x30] sm:$0xff]
    %v697 = vld [vmem:[%s0 + $0x38] sm:$0xff]
    %v698 = vld [vmem:[%s0 + $0x40] sm:$0xff]
    %v699 = vld [vmem:[%s0 + $0x48] sm:$0xff]
    %v700 = vld [vmem:[%s0 + $0x50] sm:$0xff]
    %v701 = vld [vmem:[%s0 + $0x58] sm:$0xff]
    %v702 = vld [vmem:[%s0 + $0x60] sm:$0xff]
    %v703 = vld [vmem:[%s0 + $0x68] sm:$0xff]
    %v704 = vld [vmem:[%s0 + $0x70] sm:$0xff]
    %v705 = vld [vmem:[%s0 + $0x78] sm:$0xff]
    %v706 = vadd.f32 %v644, %v690
    %v707 = vadd.f32 %v647, %v691
    %v708 = vadd.f32 %v650, %v692
    %v709 = vadd.f32 %v653, %v693
    %v710 = vadd.f32 %v656, %v694
    %v711 = vadd.f32 %v659, %v695
    %v712 = vadd.f32 %v662, %v696
    %v713 = vadd.f32 %v665, %v697
    %v714 = vadd.f32 %v668, %v698
    %v715 = vadd.f32 %v671, %v699
    %v716 = vadd.f32 %v674, %v700
    %v717 = vadd.f32 %v677, %v701
    %v718 = vadd.f32 %v680, %v702
    %v719 = vadd.f32 %v683, %v703
    %v720 = vadd.f32 %v686, %v704
    %v721 = vadd.f32 %v689, %v705
    %vm722 = vcmask 7168
    %723 = vst.msk [vmem:[%s6] sm:$0xff] %vm722, %v706
    %724 = vst.msk [vmem:[%s6 + $0x8] sm:$0xff] %vm722, %v707
    %725 = vst.msk [vmem:[%s6 + $0x10] sm:$0xff] %vm722, %v708
    %726 = vst.msk [vmem:[%s6 + $0x18] sm:$0xff] %vm722, %v709
    %727 = vst.msk [vmem:[%s6 + $0x20] sm:$0xff] %vm722, %v710
    %728 = vst.msk [vmem:[%s6 + $0x28] sm:$0xff] %vm722, %v711
    %729 = vst.msk [vmem:[%s6 + $0x30] sm:$0xff] %vm722, %v712
    %730 = vst.msk [vmem:[%s6 + $0x38] sm:$0xff] %vm722, %v713
    %731 = vst.msk [vmem:[%s6 + $0x40] sm:$0xff] %vm722, %v714
    %732 = vst.msk [vmem:[%s6 + $0x48] sm:$0xff] %vm722, %v715
    %733 = vst.msk [vmem:[%s6 + $0x50] sm:$0xff] %vm722, %v716
    %734 = vst.msk [vmem:[%s6 + $0x58] sm:$0xff] %vm722, %v717
    %735 = vst.msk [vmem:[%s6 + $0x60] sm:$0xff] %vm722, %v718
    %736 = vst.msk [vmem:[%s6 + $0x68] sm:$0xff] %vm722, %v719
    %737 = vst.msk [vmem:[%s6 + $0x70] sm:$0xff] %vm722, %v720
    %738 = vst.msk [vmem:[%s6 + $0x78] sm:$0xff] %vm722, %v721
    // Predicated region
    $region22: #{mf_forward.2} parent=1 // pred_check
      _
    $region23: #{mf_forward.2} parent=1 // pred_check_branch
      %740 = sbr.rel (0) target = $region25
    $region24: #{mf_forward.2} parent=1 // pred_region
      _
    $region25: #{mf_forward.2} parent=1 // pred_fallthru
      _
    // Predicated region
    $region26: #{mf_forward.2} parent=1 // pred_check
      _
    $region27: #{mf_forward.2} parent=1 // pred_check_branch
      %742 = sbr.rel (0) target = $region29
    $region28: #{mf_forward.2} parent=1 // pred_region
      _
    $region29: #{mf_forward.2} parent=1 // pred_fallthru
      _

</llo_original>
